<compile_context>
chip_gen: v7x
topology: tpu7x:2x2x1
jax: 0.10.0
libtpu: 0.0.40
codegen_flags: <defaults>
</compile_context>

<pallas_src>
import jax
import jax.numpy as jnp
from jax.experimental import pallas as pl
from jax.experimental.pallas import tpu as pltpu


# ----------------------------------------------------------------------------
# Helpers
# ----------------------------------------------------------------------------
def _round_up(n, m):
    return ((n + m - 1) // m) * m


def _pick_tile(n, candidates):
    """Largest candidate that evenly divides n (n is a multiple of 128)."""
    for c in candidates:
        if c <= n and n % c == 0:
            return c
    return min(n, 128)


def _pad_axis(arr, axis, target):
    pad = target - arr.shape[axis]
    if pad == 0:
        return arr
    widths = [(0, 0)] * arr.ndim
    widths[axis] = (0, pad)
    return jnp.pad(arr, widths)


# ----------------------------------------------------------------------------
# Pass 1: embed_f  (GCN-style propagation, x@W pre-folded:  h = A @ xw + b)
# ----------------------------------------------------------------------------
def embed_kernel(adj_ref, xw_ref, b_ref, h_ref):
    # adj_ref : (1, tm1, Np)   row tile of adjacency (the only big HBM stream)
    # xw_ref  : (1, Np, Dout)  precomputed x @ W for this batch
    # b_ref   : (1, Dout)      embed_f bias
    # h_ref   : (1, tm1, Dout) output embedding row tile
    a = adj_ref[0]                                             # (tm1, Np)
    xw = xw_ref[0]                                             # (Np, Dout)
    h = jnp.dot(a, xw, preferred_element_type=jnp.float32) + b_ref[...]
    h_ref[0] = h.astype(h_ref.dtype)


# ----------------------------------------------------------------------------
# Pass 2: pairwise sq. euclidean distance + sigmoid adjacency (hot phase)
#
#   sigmoid(temp*(|thr| - D)) with D = rn + cn - 2 * xs @ xs^T
#   row_term = 0.5*(temp*|thr| - temp*rn)   (B, N, 1)   precomputed in XLA
#   col_term = 0.5*temp*cn                  (B, 1, N)   precomputed in XLA
#   xst      = temp * xs^T                  (B, Dout, N) pre-scaled column side
#   =>  out  = 0.5*tanh( xs @ xst + row_term - col_term ) + 0.5
# ----------------------------------------------------------------------------
def dist_sigmoid_kernel(xs_ref, xst_ref, row_ref, col_ref, a_ref):
    # xs_ref  : (1, tm, Dout)  row tile of centered/scaled embeddings
    # xst_ref : (1, Dout, tn)  column tile, pre-transposed & pre-scaled by temp
    # row_ref : (1, tm, 1)     folded per-row term (threshold + row norms)
    # col_ref : (1, 1, tn)     folded per-column norm term
    # a_ref   : (1, tm, tn)    output soft-adjacency tile (lane-dense store)
    g = jnp.dot(xs_ref[0], xst_ref[0],
                preferred_element_type=jnp.float32)            # MXU cross term
    z = g + row_ref[0] - col_ref[0]                            # (tm, tn)
    a_ref[0] = (0.5 * jnp.tanh(z) + 0.5).astype(a_ref.dtype)   # single EUP op


# ----------------------------------------------------------------------------
# Wrapper
# ----------------------------------------------------------------------------
def dgm_c_forward(x, A, w, b, temperature, threshold, out_dtype=jnp.float32):
    """DGM_c forward (euclidean branch). Returns (x_embed, A_soft, None).

    out_dtype: set to jnp.bfloat16 on HBM-write-bound parts (v5e/v6e) if
    downstream tolerates it; default f32 keeps strict PyTorch parity.
    """
    B, N, Din = x.shape
    Dout = w.shape[1]
    Np = _round_up(N, 128)          # pad-and-slice: lane-dense tiles always

    # ---- XLA precompute (tiny): fold x @ W so pass 1 is a single matmul -----
    xw = jnp.einsum('bnd,de->bne', x, w)                       # (B, N, Dout)
    A_p = _pad_axis(_pad_axis(A, 1, Np), 2, Np)                # (B, Np, Np)
    xw_p = _pad_axis(xw, 1, Np)                                # (B, Np, Dout)

    # ---- pass 1: embed_f, tiled over (batch, row tiles), A-read bound -------
    # VMEM budget: double-buffered adjacency row tile 2*tm1*Np*4 <= 16 MiB.
    a_tile_budget = 16 * 1024 * 1024
    tm1_cap = max(8, a_tile_budget // (2 * Np * 4))
    tm1 = _pick_tile(Np, tuple(c for c in (512, 256, 128, 64, 32, 16, 8)
                               if c <= tm1_cap))

    h_p = pl.pallas_call(
        embed_kernel,
        out_shape=jax.ShapeDtypeStruct((B, Np, Dout), jnp.float32),
        grid=(B, Np // tm1),
        in_specs=[
            pl.BlockSpec((1, tm1, Np), lambda bb, ii: (bb, ii, 0)),
            pl.BlockSpec((1, Np, Dout), lambda bb, ii: (bb, 0, 0)),
            pl.BlockSpec((1, Dout), lambda bb, ii: (0, 0)),
        ],
        out_specs=pl.BlockSpec((1, tm1, Dout), lambda bb, ii: (bb, ii, 0)),
        compiler_params=pltpu.CompilerParams(
            dimension_semantics=("parallel", "parallel"),
            vmem_limit_bytes=32 * 1024 * 1024),
        cost_estimate=pl.CostEstimate(
            flops=int(2 * B * Np * Np * Dout),
            transcendentals=0,
            bytes_accessed=int(B * Np * Np * 4 + 2 * B * Np * Dout * 4)),
    )(A_p, xw_p, b)
    h = h_p[:, :N, :]                                          # (B, N, Dout)

    # ---- global reductions (tiny: B*N*Dout floats) in plain XLA -------------
    # The global max-based scale must be fully reduced over all batches before
    # any distance tile is computed, so it cannot be fused into pass 2.
    centroid = jnp.mean(h, axis=1, keepdims=True)              # (B, 1, Dout)
    diff = h - centroid
    # NOTE: matches PyTorch exactly; degenerate constant features give inf/NaN
    # just like the original (no epsilon clamp added, to stay faithful).
    scale = 0.9 / jnp.max(jnp.abs(diff))                       # global scalar
    xs = diff * scale                                          # (B, N, Dout)

    # ---- fold temperature / |threshold| / norms (tiny vectors) --------------
    temp = temperature.reshape(())
    thr_eff = temp * jnp.abs(threshold.reshape(()))
    rn = jnp.sum(xs * xs, axis=-1, keepdims=True)              # (B, N, 1)
    row_term = 0.5 * (thr_eff - temp * rn)                     # (B, N, 1)
    col_term = jnp.swapaxes(0.5 * temp * rn, 1, 2)             # (B, 1, N)
    xst = temp * jnp.swapaxes(xs, 1, 2)                        # (B, Dout, N)

    xs_p = _pad_axis(xs, 1, Np)
    xst_p = _pad_axis(xst, 2, Np)
    row_p = _pad_axis(row_term, 1, Np)
    col_p = _pad_axis(col_term, 2, Np)

    # ---- pass 2: Gram-expansion distance + sigmoid, lane-dense tiles --------
    tm = _pick_tile(Np, (512, 256, 128))
    tn = _pick_tile(Np, (1024, 512, 256, 128))
    grid = (B, Np // tm, Np // tn)

    cost = pl.CostEstimate(
        flops=int(B * Np * Np * (2 * Dout + 4)),
        transcendentals=int(B * Np * Np),
        bytes_accessed=int(B * Np * Np * jnp.dtype(out_dtype).itemsize
                           + 2 * B * Np * (Dout + 1) * 4),
    )

    a_p = pl.pallas_call(
        dist_sigmoid_kernel,
        out_shape=jax.ShapeDtypeStruct((B, Np, Np), out_dtype),
        grid=grid,
        in_specs=[
            pl.BlockSpec((1, tm, Dout), lambda bb, ii, jj: (bb, ii, 0)),
            pl.BlockSpec((1, Dout, tn), lambda bb, ii, jj: (bb, 0, jj)),
            pl.BlockSpec((1, tm, 1), lambda bb, ii, jj: (bb, ii, 0)),
            pl.BlockSpec((1, 1, tn), lambda bb, ii, jj: (bb, 0, jj)),
        ],
        out_specs=pl.BlockSpec((1, tm, tn), lambda bb, ii, jj: (bb, ii, jj)),
        compiler_params=pltpu.CompilerParams(
            dimension_semantics=("parallel", "parallel", "parallel"),
            vmem_limit_bytes=32 * 1024 * 1024),
        cost_estimate=cost,
    )(xs_p, xst_p, row_p, col_p)

    a_soft = a_p[:, :N, :N]
    return h, a_soft, None


# ----------------------------------------------------------------------------
# Pure-JAX reference for correctness checking
# ----------------------------------------------------------------------------
def _reference(x, A, w, b, temperature, threshold):
    h = jnp.einsum('bnm,bmd->bnd', A, x) @ w + b
    centroid = h.mean(axis=1, keepdims=True)
    diff = h - centroid
    scale = 0.9 / jnp.max(jnp.abs(diff))
    xs = diff * scale
    d2 = jnp.sum((xs[:, :, None, :] - xs[:, None, :, :]) ** 2, axis=-1)
    a_soft = jax.nn.sigmoid(temperature[0] * (jnp.abs(threshold[0]) - d2))
    return h, a_soft


if __name__ == "__main__":
    key = jax.random.PRNGKey(0)
    B, N, Din, Dout = 2, 16, 4, 4          # DGM_c.input_dim = 4
    k1, k2, k3, k4 = jax.random.split(key, 4)

    x = jax.random.normal(k1, (B, N, Din), dtype=jnp.float32)
    # row-stochastic synthetic adjacency
    A = jax.nn.softmax(jax.random.normal(k2, (B, N, N), dtype=jnp.float32), axis=-1)

    # deterministic synthetic embed_f parameters (linear / GCN layer 4 -> 4)
    w = 0.5 * jax.random.normal(k3, (Din, Dout), dtype=jnp.float32)
    b = 0.1 * jax.random.normal(k4, (1, Dout), dtype=jnp.float32)

    # module parameters as in __init__
    temperature = jnp.array([1.0], dtype=jnp.float32)   # nn.Parameter(tensor(1.))
    threshold = jnp.array([0.5], dtype=jnp.float32)     # nn.Parameter(tensor(0.5))

    x_embed, A_soft, _ = dgm_c_forward(x, A, w, b, temperature, threshold)
    jax.block_until_ready((x_embed, A_soft))

    assert x_embed.shape == (B, N, Dout)
    assert A_soft.shape == (B, N, N)

    h_ref, a_ref = _reference(x, A, w, b, temperature, threshold)
    assert bool(jnp.all(jnp.isfinite(x_embed))) and bool(jnp.all(jnp.isfinite(A_soft)))
    assert bool(jnp.allclose(x_embed, h_ref, atol=1e-2, rtol=1e-2))
    assert bool(jnp.allclose(A_soft, a_ref, atol=1e-2, rtol=1e-2))

    print("KERNEL_OK")
</pallas_src>

<mosaic_0001>
module attributes {stable_mosaic.version = 11 : i64} {
  func.func @embed_kernel(%arg0: i32, %arg1: i32, %arg2: memref<1x128x128xf32, #tpu.memory_space<vmem>>, %arg3: memref<1x128x4xf32, #tpu.memory_space<vmem>>, %arg4: memref<1x4xf32, #tpu.memory_space<vmem>>, %arg5: memref<1x128x4xf32, #tpu.memory_space<vmem>>) attributes {dimension_semantics = [#tpu.dimension_semantics<parallel>, #tpu.dimension_semantics<parallel>], iteration_bounds = array<i64: 2, 1>, scalar_prefetch = 0 : i64, scratch_operands = 0 : i64, tpu.core_type = #tpu.core_type<tc>, window_params = [{transform_indices = @transform_0, window_bounds = array<i64: 1, 128, 128>}, {transform_indices = @transform_1, window_bounds = array<i64: 1, 128, 4>}, {pipeline_mode = #tpu.pipeline_mode<synchronous>, transform_indices = @transform_2, window_bounds = array<i64: 1, 4>}, {transform_indices = @transform_3, window_bounds = array<i64: 1, 128, 4>}]} {
    %c0 = arith.constant 0 : index
    %c0_0 = arith.constant 0 : index
    %c0_1 = arith.constant 0 : index
    %0 = vector.load %arg2[%c0, %c0_0, %c0_1] : memref<1x128x128xf32, #tpu.memory_space<vmem>>, vector<1x128x128xf32>
    %1 = vector.shape_cast %0 : vector<1x128x128xf32> to vector<128x128xf32>
    %c0_2 = arith.constant 0 : index
    %c0_3 = arith.constant 0 : index
    %c0_4 = arith.constant 0 : index
    %2 = vector.load %arg3[%c0_2, %c0_3, %c0_4] : memref<1x128x4xf32, #tpu.memory_space<vmem>>, vector<1x128x4xf32>
    %3 = vector.shape_cast %2 : vector<1x128x4xf32> to vector<128x4xf32>
    %cst = arith.constant dense<0.000000e+00> : vector<128x4xf32>
    %4 = tpu.matmul %1, %3, %cst {dimension_numbers = #tpu.dot_dimension_numbers<[1], [0], [0], [1], [0, 0, 1, 1], [], []>} : vector<128x128xf32>, vector<128x4xf32>, vector<128x4xf32> -> vector<128x4xf32>
    %c0_5 = arith.constant 0 : index
    %c0_6 = arith.constant 0 : index
    %5 = vector.load %arg4[%c0_5, %c0_6] : memref<1x4xf32, #tpu.memory_space<vmem>>, vector<1x4xf32>
    %6 = vector.broadcast %5 : vector<1x4xf32> to vector<128x4xf32>
    %7 = arith.addf %4, %6 : vector<128x4xf32>
    %c0_7 = arith.constant 0 : index
    %c0_8 = arith.constant 0 : index
    %c0_9 = arith.constant 0 : index
    %8 = vector.load %arg5[%c0_7, %c0_8, %c0_9] : memref<1x128x4xf32, #tpu.memory_space<vmem>>, vector<1x128x4xf32>
    %9 = vector.shape_cast %8 : vector<1x128x4xf32> to vector<128x4xf32>
    %10 = vector.shape_cast %7 : vector<128x4xf32> to vector<1x128x4xf32>
    tpu.vector_store %arg5[%c0_7, %c0_8, %c0_9], %10 {strides = array<i32>} : memref<1x128x4xf32, #tpu.memory_space<vmem>>, vector<1x128x4xf32>,
    return
  }
  func.func @transform_0(%arg0: i32, %arg1: i32) -> (i32, i32, i32) {
    %c0_i32 = arith.constant 0 : i32
    %c0_i32_0 = arith.constant 0 : i32
    return %arg0, %arg1, %c0_i32 : i32, i32, i32
  }
  func.func @transform_1(%arg0: i32, %arg1: i32) -> (i32, i32, i32) {
    %c0_i32 = arith.constant 0 : i32
    %c0_i32_0 = arith.constant 0 : i32
    %c0_i32_1 = arith.constant 0 : i32
    return %arg0, %c0_i32, %c0_i32_0 : i32, i32, i32
  }
  func.func @transform_2(%arg0: i32, %arg1: i32) -> (i32, i32) {
    %c0_i32 = arith.constant 0 : i32
    %c0_i32_0 = arith.constant 0 : i32
    %c0_i32_1 = arith.constant 0 : i32
    return %c0_i32, %c0_i32_0 : i32, i32
  }
  func.func @transform_3(%arg0: i32, %arg1: i32) -> (i32, i32, i32) {
    %c0_i32 = arith.constant 0 : i32
    %c0_i32_0 = arith.constant 0 : i32
    return %arg0, %arg1, %c0_i32 : i32, i32, i32
  }
}

</mosaic_0001>

<llo_original>
// kernel: tpu_custom_call.1
$region0: #{tpu_custom_call.1}
  #allocation0 [shape = 'u32[]', space=smem, size = 0x4, offset = 0x4, fixed_abs, tag = 'smem constant byte address 0x4 - core index']
  #allocation1 [shape = 'u32[144,128]{1,0:T(1,128)}', space=vmem, size = 0x12000, scoped, tag = 'internal scratch']
  %s0 = inlined_call_operand.vmem [shape: f32[2,128,128], index: 0, kind: input, shape index: {}]
  %s1 = inlined_call_operand.vmem [shape: f32[2,128,4], index: 1, kind: input, shape index: {}]
  %s2 = inlined_call_operand.vmem [shape: f32[1,4], index: 2, kind: input, shape index: {}]
  %s3 = inlined_call_operand.vmem [shape: f32[2,128,4], index: 3, kind: output, shape index: {}]
  %s4 = sld [smem:[#allocation0]]
  $region45: #{tpu_custom_call.1} parent=0
    _
  %s6 = ssub.s32 1, %s4
  %s7 = scalar_select 0, %s6, %s4
  loop: start=0, step=1, limit=4
  $region2: #{tpu_custom_call.1} parent=0 // loop_pre_header
    _
  $region3: #{tpu_custom_call.1} parent=0 // loop_header
    %s9 = sphi 0, %s13
    %p10 = scmp.ge.s32.totalorder %s9, 4
    %s16 = sphi 0, %s28
    %s17 = sphi 0, %s24
    %s18 = sphi 0, %s16
    %s19 = sphi 0, %s17
    %s20 = sphi 0, %s18
    %s21 = sphi 0, %s19
    %s33 = sphi 0, %s35
    %s36 = sphi 0, %s33
    %s37 = sphi 0, %s36
    %s53 = sphi 0, %s37
    %s59 = sphi 0, %s61
    %s62 = sphi 0, %s59
    %s63 = sphi 0, %s62
    %s79 = sphi 0, %s63
    %s83 = sphi 0, %s83
    %s85 = sphi 0, %s83
    %s86 = sphi 0, %s85
    %s100 = sphi 0, %s86
    %s108 = sphi 0, %s110
    %s111 = sphi 0, %s108
    %s112 = sphi 0, %s111
    %s128 = sphi 0, %s112
  $region4: #{tpu_custom_call.1} parent=0 // loop_header_branch
    %12 = sbr.rel (%p10) target = $region8
  $region5: #{tpu_custom_call.1} parent=0 // loop_body
    %s14 = ssub.s32 %s9, 1
    %s15 = ssub.s32 %s9, 2
    %s22 = sadd.s32 1, %s17
    %p23 = scmp.ge.s32.totalorder %s22, 1
    %s24 = scalar_select %p23, 0, %s22
    %s25 = sadd.s32 1, %s16
    %s26 = scalar_select %p23, %s25, %s16
    %p27 = scmp.ge.s32.totalorder %s26, 2
    %s28 = scalar_select %p27, 0, %s26
    %s29 = ssub.s32 %s16, %s28
    %s30 = ssub.s32 %s17, %s24
    %s31 = sor.u32 %s29, %s30
    %p32 = scmp.eq.s32.totalorder %s31, 0
    %s34 = sadd.s32 %s33, 1
    %s35 = scalar_select %p32, %s33, %s34
    %p38 = pneg %p32
    %p39 = scmp.eq.s32.totalorder %s9, 1
    %p40 = por %p38, %p39
    %p41 = scmp.ne.s32.totalorder %s33, %s36
    %p42 = scmp.eq.s32.totalorder %s9, 0
    %p43 = por %p41, %p42
    %p44 = scmp.ne.s32.totalorder %s33, %s36
    %p45 = scmp.eq.s32.totalorder %s14, 1
    %p46 = por %p44, %p45
    %p47 = scmp.ne.s32.totalorder %s36, %s37
    %p48 = scmp.eq.s32.totalorder %s14, 0
    %p49 = por %p47, %p48
    %p50 = scmp.ne.s32.totalorder %s36, %s37
    %p51 = scmp.eq.s32.totalorder %s15, 1
    %p52 = por %p50, %p51
    %p54 = scmp.ne.s32.totalorder %s37, %s53
    %p55 = scmp.eq.s32.totalorder %s15, 0
    %p56 = por %p54, %p55
    %s57 = ssub.s32 %s16, %s28
    %p58 = scmp.eq.s32.totalorder %s57, 0
    %s60 = sadd.s32 %s59, 1
    %s61 = scalar_select %p58, %s59, %s60
    %p64 = pneg %p58
    %p65 = scmp.eq.s32.totalorder %s9, 1
    %p66 = por %p64, %p65
    %p67 = scmp.ne.s32.totalorder %s59, %s62
    %p68 = scmp.eq.s32.totalorder %s9, 0
    %p69 = por %p67, %p68
    %p70 = scmp.ne.s32.totalorder %s59, %s62
    %p71 = scmp.eq.s32.totalorder %s14, 1
    %p72 = por %p70, %p71
    %p73 = scmp.ne.s32.totalorder %s62, %s63
    %p74 = scmp.eq.s32.totalorder %s14, 0
    %p75 = por %p73, %p74
    %p76 = scmp.ne.s32.totalorder %s62, %s63
    %p77 = scmp.eq.s32.totalorder %s15, 1
    %p78 = por %p76, %p77
    %p80 = scmp.ne.s32.totalorder %s63, %s79
    %p81 = scmp.eq.s32.totalorder %s15, 0
    %p82 = por %p80, %p81
    %s84 = sadd.s32 %s83, 1
    %p87 = scmp.eq.s32.totalorder %s9, 1
    %p88 = scmp.ne.s32.totalorder %s83, %s85
    %p89 = scmp.eq.s32.totalorder %s9, 0
    %p90 = por %p88, %p89
    %p91 = scmp.ne.s32.totalorder %s83, %s85
    %p92 = scmp.eq.s32.totalorder %s14, 1
    %p93 = por %p91, %p92
    %p94 = scmp.ne.s32.totalorder %s85, %s86
    %p95 = scmp.eq.s32.totalorder %s14, 0
    %p96 = por %p94, %p95
    %p97 = scmp.ne.s32.totalorder %s85, %s86
    %p98 = scmp.eq.s32.totalorder %s15, 1
    %p99 = por %p97, %p98
    %p101 = scmp.ne.s32.totalorder %s86, %s100
    %p102 = scmp.eq.s32.totalorder %s15, 0
    %p103 = por %p101, %p102
    %s104 = ssub.s32 %s16, %s28
    %s105 = ssub.s32 %s17, %s24
    %s106 = sor.u32 %s104, %s105
    %p107 = scmp.eq.s32.totalorder %s106, 0
    %s109 = sadd.s32 %s108, 1
    %s110 = scalar_select %p107, %s108, %s109
    %p113 = pneg %p107
    %p114 = scmp.eq.s32.totalorder %s9, 1
    %p115 = por %p113, %p114
    %p116 = scmp.ne.s32.totalorder %s108, %s111
    %p117 = scmp.eq.s32.totalorder %s9, 0
    %p118 = por %p116, %p117
    %p119 = scmp.ne.s32.totalorder %s108, %s111
    %p120 = scmp.eq.s32.totalorder %s14, 1
    %p121 = por %p119, %p120
    %p122 = scmp.ne.s32.totalorder %s111, %s112
    %p123 = scmp.eq.s32.totalorder %s14, 0
    %p124 = por %p122, %p123
    %p125 = scmp.ne.s32.totalorder %s111, %s112
    %p126 = scmp.eq.s32.totalorder %s15, 1
    %p127 = por %p125, %p126
    %p129 = scmp.ne.s32.totalorder %s112, %s128
    %p130 = scmp.eq.s32.totalorder %s15, 0
    %p131 = por %p129, %p130
    %p132 = scmp.le.s32.totalorder 1, %s9
    %p133 = scmp.lt.s32.totalorder %s9, 3
    %p134 = pnand %p132, %p133
    %p135 = pneg %p134
    // Predicated region
    $region9: #{tpu_custom_call.1} parent=5 // pred_check
      _
    $region10: #{tpu_custom_call.1} parent=5 // pred_check_branch
      %137 = sbr.rel (%p134) target = $region12
    $region11: #{tpu_custom_call.1} parent=5 // pred_region
      %s138 = ssub.s32 %s9, 1
      // Predicated region
      $region13: #{tpu_custom_call.1} parent=11 // pred_check
        %p139 = pneg %p96
      $region14: #{tpu_custom_call.1} parent=11 // pred_check_branch
        %141 = sbr.rel (%p139) target = $region16
      $region15: #{tpu_custom_call.1} parent=11 // pred_region
        _
      $region16: #{tpu_custom_call.1} parent=11 // pred_fallthru
        _
    $region12: #{tpu_custom_call.1} parent=5 // pred_fallthru
      _
    %p142 = scmp.lt.s32.totalorder %s9, 2
    // Predicated region
    $region17: #{tpu_custom_call.1} parent=5 // pred_check
      %p143 = pneg %p142
    $region18: #{tpu_custom_call.1} parent=5 // pred_check_branch
      %145 = sbr.rel (%p143) target = $region20
    $region19: #{tpu_custom_call.1} parent=5 // pred_region
      // Predicated region
      $region21: #{tpu_custom_call.1} parent=19 // pred_check
        %p146 = pneg %p43
      $region22: #{tpu_custom_call.1} parent=19 // pred_check_branch
        %148 = sbr.rel (%p146) target = $region24
      $region23: #{tpu_custom_call.1} parent=19 // pred_region
        %s149 = smul.u32 16, %s17
        %p150 = scmp.lt.s32.totalorder %s16, 1
        %s151 = scalar_select %p150, %s16, 1
        %p152 = scmp.lt.s32.totalorder %s149, 15
        %s153 = scalar_select %p152, %s149, 15
        %s154 = smul.addr %s151, 16
        %s155 = sadd.s32 %s153, %s154
        %s156 = smul.addr %s155, 8
        %s157 = scalar_lea.vmem %s0, %s156
        %s158 = smul.u32 16, %s17
      $region24: #{tpu_custom_call.1} parent=19 // pred_fallthru
        _
      // Predicated region
      $region25: #{tpu_custom_call.1} parent=19 // pred_check
        %p159 = pneg %p69
      $region26: #{tpu_custom_call.1} parent=19 // pred_check_branch
        %161 = sbr.rel (%p159) target = $region28
      $region27: #{tpu_custom_call.1} parent=19 // pred_region
        %p162 = scmp.lt.s32.totalorder %s16, 1
        %s163 = scalar_select %p162, %s16, 1
        %s164 = smul.addr %s163, 16
        %s165 = smul.addr %s164, 8
        %s166 = scalar_lea.vmem %s1, %s165
      $region28: #{tpu_custom_call.1} parent=19 // pred_fallthru
        _
    $region20: #{tpu_custom_call.1} parent=5 // pred_fallthru
      _
    %p167 = scmp.le.s32.totalorder 1, %s9
    %p168 = scmp.lt.s32.totalorder %s9, 3
    %p169 = pnand %p167, %p168
    %p170 = pneg %p169
    // Predicated region
    $region29: #{tpu_custom_call.1} parent=5 // pred_check
      _
    $region30: #{tpu_custom_call.1} parent=5 // pred_check_branch
      %172 = sbr.rel (%p169) target = $region32
    $region31: #{tpu_custom_call.1} parent=5 // pred_region
      %s173 = ssub.s32 %s9, 1
      %s174 = smul.u32 16, %s19
      %p175 = scmp.lt.s32.totalorder %s18, 1
      %s176 = scalar_select %p175, %s18, 1
      %p177 = scmp.lt.s32.totalorder %s174, 15
      %s178 = scalar_select %p177, %s174, 15
      %s179 = smul.addr %s176, 16
      %s180 = sadd.s32 %s178, %s179
      %s181 = smul.addr %s180, 8
      %s182 = scalar_lea.vmem %s0, %s181
      %p183 = pneg %p49
      %p184 = pneg %p46
      %p185 = scmp.lt.s32.totalorder %s18, 1
      %s186 = scalar_select %p185, %s18, 1
      %s187 = smul.addr %s186, 16
      %s188 = smul.addr %s187, 8
      %s189 = scalar_lea.vmem %s1, %s188
      %p190 = pneg %p75
      %p191 = pneg %p72
      %p192 = pneg %p96
      %p193 = pneg %p93
      %p194 = pneg %p124
      %p195 = pneg %p121
      %s196 = smul.u32 16, %s19
      %p197 = scmp.lt.s32.totalorder %s18, 1
      %s198 = scalar_select %p197, %s18, 1
      %p199 = scmp.lt.s32.totalorder %s196, 15
      %s200 = scalar_select %p199, %s196, 15
      %s201 = smul.addr %s198, 16
      %s202 = sadd.s32 %s200, %s201
      %s203 = smul.addr %s202, 8
      %s204 = scalar_lea.vmem %s3, %s203
      %s205 = smul.u32 16, %s19
      %p206 = scmp.lt.s32.totalorder %s18, 1
      %s207 = scalar_select %p206, %s18, 1
      %p208 = scmp.lt.s32.totalorder %s205, 15
      %s209 = scalar_select %p208, %s205, 15
      %s210 = smul.addr %s207, 16
      %s211 = sadd.s32 %s209, %s210
      %s212 = smul.addr %s211, 8
      %s213 = scalar_lea.vmem %s0, %s212
      %s214 = smul.u32 16, %s19
      %p215 = scmp.lt.s32.totalorder %s18, 1
      %s216 = scalar_select %p215, %s18, 1
      %s217 = smul.addr %s216, 16
      %s218 = smul.addr %s217, 8
      %s219 = scalar_lea.vmem %s1, %s218
      %s220 = smul.u32 16, %s19
      %p221 = scmp.lt.s32.totalorder %s18, 1
      %s222 = scalar_select %p221, %s18, 1
      %p223 = scmp.lt.s32.totalorder %s220, 15
      %s224 = scalar_select %p223, %s220, 15
      %s225 = smul.addr %s222, 16
      %s226 = sadd.s32 %s224, %s225
      %s227 = smul.addr %s226, 8
      %s228 = scalar_lea.vmem %s3, %s227
      %s229 = smul.u32 16, %s19
      %v230 = vld [vmem:[%s213] sm:$0xff]
      %v231 = vld [vmem:[%s213 + $0x8] sm:$0xff]
      %v232 = vld [vmem:[%s213 + $0x10] sm:$0xff]
      %v233 = vld [vmem:[%s213 + $0x18] sm:$0xff]
      %v234 = vld [vmem:[%s213 + $0x20] sm:$0xff]
      %v235 = vld [vmem:[%s213 + $0x28] sm:$0xff]
      %v236 = vld [vmem:[%s213 + $0x30] sm:$0xff]
      %v237 = vld [vmem:[%s213 + $0x38] sm:$0xff]
      %v238 = vld [vmem:[%s213 + $0x40] sm:$0xff]
      %v239 = vld [vmem:[%s213 + $0x48] sm:$0xff]
      %v240 = vld [vmem:[%s213 + $0x50] sm:$0xff]
      %v241 = vld [vmem:[%s213 + $0x58] sm:$0xff]
      %v242 = vld [vmem:[%s213 + $0x60] sm:$0xff]
      %v243 = vld [vmem:[%s213 + $0x68] sm:$0xff]
      %v244 = vld [vmem:[%s213 + $0x70] sm:$0xff]
      %v245 = vld [vmem:[%s213 + $0x78] sm:$0xff]
      %v246 = vld [vmem:[%s219] sm:$0xff]
      %v247 = vld [vmem:[%s219 + $0x8] sm:$0xff]
      %v248 = vld [vmem:[%s219 + $0x10] sm:$0xff]
      %v249 = vld [vmem:[%s219 + $0x18] sm:$0xff]
      %v250 = vld [vmem:[%s219 + $0x20] sm:$0xff]
      %v251 = vld [vmem:[%s219 + $0x28] sm:$0xff]
      %v252 = vld [vmem:[%s219 + $0x30] sm:$0xff]
      %v253 = vld [vmem:[%s219 + $0x38] sm:$0xff]
      %v254 = vld [vmem:[%s219 + $0x40] sm:$0xff]
      %v255 = vld [vmem:[%s219 + $0x48] sm:$0xff]
      %v256 = vld [vmem:[%s219 + $0x50] sm:$0xff]
      %v257 = vld [vmem:[%s219 + $0x58] sm:$0xff]
      %v258 = vld [vmem:[%s219 + $0x60] sm:$0xff]
      %v259 = vld [vmem:[%s219 + $0x68] sm:$0xff]
      %v260 = vld [vmem:[%s219 + $0x70] sm:$0xff]
      %v261 = vld [vmem:[%s219 + $0x78] sm:$0xff]
      %v262 = vld [vmem:[%s2] sm:$0x1]
      %v264 = vlaneseq
      %v265 = vshrl.u32 %v264, 7
      %v266 = vsub.s32 0, %v265
      %v267 = vrot.slane %v262, %v266
      %269 = vmatprep.subr.mxu0 0.0
      %270 = vmatpush1.msra.mxu0 %v246
      %271 = vmatprep.subr.mxu0 0.0
      %272 = vmatpush1.msra.mxu0 %v247
      %273 = vmatprep.subr.mxu0 0.0
      %274 = vmatpush1.msra.mxu0 %v248
      %275 = vmatprep.subr.mxu0 0.0
      %276 = vmatpush1.msra.mxu0 %v249
      %277 = vmatprep.subr.mxu0 0.0
      %278 = vmatpush1.msra.mxu0 %v250
      %279 = vmatprep.subr.mxu0 0.0
      %280 = vmatpush1.msra.mxu0 %v251
      %281 = vmatprep.subr.mxu0 0.0
      %282 = vmatpush1.msra.mxu0 %v252
      %283 = vmatprep.subr.mxu0 0.0
      %284 = vmatpush1.msra.mxu0 %v253
      %285 = vmatprep.subr.mxu0 0.0
      %286 = vmatpush1.msra.mxu0 %v254
      %287 = vmatprep.subr.mxu0 0.0
      %288 = vmatpush1.msra.mxu0 %v255
      %289 = vmatprep.subr.mxu0 0.0
      %290 = vmatpush1.msra.mxu0 %v256
      %291 = vmatprep.subr.mxu0 0.0
      %292 = vmatpush1.msra.mxu0 %v257
      %293 = vmatprep.subr.mxu0 0.0
      %294 = vmatpush1.msra.mxu0 %v258
      %295 = vmatprep.subr.mxu0 0.0
      %296 = vmatpush1.msra.mxu0 %v259
      %297 = vmatprep.subr.mxu0 0.0
      %298 = vmatpush1.msra.mxu0 %v260
      %299 = vmatprep.subr.mxu0 0.0
      %300 = vmatpush1.msra.mxu0 %v261
      %301 = vmatprep.subr.mxu0 0.0
      %302 = vmatpush1.msra.mxu0 0.0
      %303 = vmatprep.subr.mxu0 0.0
      %304 = vmatpush1.msra.mxu0 0.0
      %305 = vmatprep.subr.mxu0 0.0
      %306 = vmatpush1.msra.mxu0 0.0
      %307 = vmatprep.subr.mxu0 0.0
      %308 = vmatpush1.msra.mxu0 0.0
      %309 = vmatprep.subr.mxu0 0.0
      %310 = vmatpush1.msra.mxu0 0.0
      %311 = vmatprep.subr.mxu0 0.0
      %312 = vmatpush1.msra.mxu0 0.0
      %313 = vmatprep.subr.mxu0 0.0
      %314 = vmatpush1.msra.mxu0 0.0
      %315 = vmatprep.subr.mxu0 0.0
      %316 = vmatpush1.msra.mxu0 0.0
      %317 = vmatprep.subr.mxu0 0.0
      %318 = vmatpush1.msra.mxu0 0.0
      %319 = vmatprep.subr.mxu0 0.0
      %320 = vmatpush1.msra.mxu0 0.0
      %321 = vmatprep.subr.mxu0 0.0
      %322 = vmatpush1.msra.mxu0 0.0
      %323 = vmatprep.subr.mxu0 0.0
      %324 = vmatpush1.msra.mxu0 0.0
      %325 = vmatprep.subr.mxu0 0.0
      %326 = vmatpush1.msra.mxu0 0.0
      %327 = vmatprep.subr.mxu0 0.0
      %328 = vmatpush1.msra.mxu0 0.0
      %329 = vmatprep.subr.mxu0 0.0
      %330 = vmatpush1.msra.mxu0 0.0
      %331 = vmatprep.subr.mxu0 0.0
      %332 = vmatpush1.msra.mxu0 0.0
      %333 = vmatprep.mubr.f32.mxu0 0.0
      %334 = vmatmul.mubr.f32.gmra.mrb[0].mxu0 %v230
      %v335 = vpop.f32.mrb[0].mxu0
      %v336 = vadd.f32 %v267, %v335
      %v337 = vpop.f32.mrb[0].mxu0
      %338 = vmatprep.mubr.f32.mxu0 0.0
      %339 = vmatmul.mubr.f32.gmra.mrb[0].mxu0 %v231
      %v340 = vpop.f32.mrb[0].mxu0
      %v341 = vadd.f32 %v267, %v340
      %v342 = vpop.f32.mrb[0].mxu0
      %343 = vmatprep.mubr.f32.mxu0 0.0
      %344 = vmatmul.mubr.f32.gmra.mrb[0].mxu0 %v232
      %v345 = vpop.f32.mrb[0].mxu0
      %v346 = vadd.f32 %v267, %v345
      %v347 = vpop.f32.mrb[0].mxu0
      %348 = vmatprep.mubr.f32.mxu0 0.0
      %349 = vmatmul.mubr.f32.gmra.mrb[0].mxu0 %v233
      %v350 = vpop.f32.mrb[0].mxu0
      %v351 = vadd.f32 %v267, %v350
      %v352 = vpop.f32.mrb[0].mxu0
      %353 = vmatprep.mubr.f32.mxu0 0.0
      %354 = vmatmul.mubr.f32.gmra.mrb[0].mxu0 %v234
      %v355 = vpop.f32.mrb[0].mxu0
      %v356 = vadd.f32 %v267, %v355
      %v357 = vpop.f32.mrb[0].mxu0
      %358 = vmatprep.mubr.f32.mxu0 0.0
      %359 = vmatmul.mubr.f32.gmra.mrb[0].mxu0 %v235
      %v360 = vpop.f32.mrb[0].mxu0
      %v361 = vadd.f32 %v267, %v360
      %v362 = vpop.f32.mrb[0].mxu0
      %363 = vmatprep.mubr.f32.mxu0 0.0
      %364 = vmatmul.mubr.f32.gmra.mrb[0].mxu0 %v236
      %v365 = vpop.f32.mrb[0].mxu0
      %v366 = vadd.f32 %v267, %v365
      %v367 = vpop.f32.mrb[0].mxu0
      %368 = vmatprep.mubr.f32.mxu0 0.0
      %369 = vmatmul.mubr.f32.gmra.mrb[0].mxu0 %v237
      %v370 = vpop.f32.mrb[0].mxu0
      %v371 = vadd.f32 %v267, %v370
      %v372 = vpop.f32.mrb[0].mxu0
      %373 = vmatprep.mubr.f32.mxu0 0.0
      %374 = vmatmul.mubr.f32.gmra.mrb[0].mxu0 %v238
      %v375 = vpop.f32.mrb[0].mxu0
      %v376 = vadd.f32 %v267, %v375
      %v377 = vpop.f32.mrb[0].mxu0
      %378 = vmatprep.mubr.f32.mxu0 0.0
      %379 = vmatmul.mubr.f32.gmra.mrb[0].mxu0 %v239
      %v380 = vpop.f32.mrb[0].mxu0
      %v381 = vadd.f32 %v267, %v380
      %v382 = vpop.f32.mrb[0].mxu0
      %383 = vmatprep.mubr.f32.mxu0 0.0
      %384 = vmatmul.mubr.f32.gmra.mrb[0].mxu0 %v240
      %v385 = vpop.f32.mrb[0].mxu0
      %v386 = vadd.f32 %v267, %v385
      %v387 = vpop.f32.mrb[0].mxu0
      %388 = vmatprep.mubr.f32.mxu0 0.0
      %389 = vmatmul.mubr.f32.gmra.mrb[0].mxu0 %v241
      %v390 = vpop.f32.mrb[0].mxu0
      %v391 = vadd.f32 %v267, %v390
      %v392 = vpop.f32.mrb[0].mxu0
      %393 = vmatprep.mubr.f32.mxu0 0.0
      %394 = vmatmul.mubr.f32.gmra.mrb[0].mxu0 %v242
      %v395 = vpop.f32.mrb[0].mxu0
      %v396 = vadd.f32 %v267, %v395
      %v397 = vpop.f32.mrb[0].mxu0
      %398 = vmatprep.mubr.f32.mxu0 0.0
      %399 = vmatmul.mubr.f32.gmra.mrb[0].mxu0 %v243
      %v400 = vpop.f32.mrb[0].mxu0
      %v401 = vadd.f32 %v267, %v400
      %v402 = vpop.f32.mrb[0].mxu0
      %403 = vmatprep.mubr.f32.mxu0 0.0
      %404 = vmatmul.mubr.f32.gmra.mrb[0].mxu0 %v244
      %v405 = vpop.f32.mrb[0].mxu0
      %v406 = vadd.f32 %v267, %v405
      %v407 = vpop.f32.mrb[0].mxu0
      %408 = vmatprep.mubr.f32.mxu0 0.0
      %409 = vmatmul.mubr.f32.gmra.mrb[0].mxu0 %v245
      %v410 = vpop.f32.mrb[0].mxu0
      %v411 = vadd.f32 %v267, %v410
      %v412 = vpop.f32.mrb[0].mxu0
      %413 = vdwg.mxu0
      %vm414 = vcmask 31744
      %415 = vst.msk [vmem:[%s228] sm:$0xff] %vm414, %v336
      %416 = vst.msk [vmem:[%s228 + $0x8] sm:$0xff] %vm414, %v341
      %417 = vst.msk [vmem:[%s228 + $0x10] sm:$0xff] %vm414, %v346
      %418 = vst.msk [vmem:[%s228 + $0x18] sm:$0xff] %vm414, %v351
      %419 = vst.msk [vmem:[%s228 + $0x20] sm:$0xff] %vm414, %v356
      %420 = vst.msk [vmem:[%s228 + $0x28] sm:$0xff] %vm414, %v361
      %421 = vst.msk [vmem:[%s228 + $0x30] sm:$0xff] %vm414, %v366
      %422 = vst.msk [vmem:[%s228 + $0x38] sm:$0xff] %vm414, %v371
      %423 = vst.msk [vmem:[%s228 + $0x40] sm:$0xff] %vm414, %v376
      %424 = vst.msk [vmem:[%s228 + $0x48] sm:$0xff] %vm414, %v381
      %425 = vst.msk [vmem:[%s228 + $0x50] sm:$0xff] %vm414, %v386
      %426 = vst.msk [vmem:[%s228 + $0x58] sm:$0xff] %vm414, %v391
      %427 = vst.msk [vmem:[%s228 + $0x60] sm:$0xff] %vm414, %v396
      %428 = vst.msk [vmem:[%s228 + $0x68] sm:$0xff] %vm414, %v401
      %429 = vst.msk [vmem:[%s228 + $0x70] sm:$0xff] %vm414, %v406
      %430 = vst.msk [vmem:[%s228 + $0x78] sm:$0xff] %vm414, %v411
      %s431 = smul.u32 16, %s19
      %p432 = scmp.lt.s32.totalorder %s18, 1
      %s433 = scalar_select %p432, %s18, 1
      %p434 = scmp.lt.s32.totalorder %s431, 15
      %s435 = scalar_select %p434, %s431, 15
      %s436 = smul.addr %s433, 16
      %s437 = sadd.s32 %s435, %s436
      %s438 = smul.addr %s437, 8
      %s439 = scalar_lea.vmem %s3, %s438
      // Predicated region
      $region33: #{tpu_custom_call.1} parent=31 // pred_check
        %p440 = pneg %p121
      $region34: #{tpu_custom_call.1} parent=31 // pred_check_branch
        %442 = sbr.rel (%p440) target = $region36
      $region35: #{tpu_custom_call.1} parent=31 // pred_region
        %s443 = smul.u32 16, %s19
      $region36: #{tpu_custom_call.1} parent=31 // pred_fallthru
        _
    $region32: #{tpu_custom_call.1} parent=5 // pred_fallthru
      _
    %p444 = scmp.le.s32.totalorder 2, %s9
    // Predicated region
    $region37: #{tpu_custom_call.1} parent=5 // pred_check
      %p445 = pneg %p444
    $region38: #{tpu_custom_call.1} parent=5 // pred_check_branch
      %447 = sbr.rel (%p445) target = $region40
    $region39: #{tpu_custom_call.1} parent=5 // pred_region
      %s448 = ssub.s32 %s9, 2
      // Predicated region
      $region41: #{tpu_custom_call.1} parent=39 // pred_check
        %p449 = pneg %p127
      $region42: #{tpu_custom_call.1} parent=39 // pred_check_branch
        %451 = sbr.rel (%p449) target = $region44
      $region43: #{tpu_custom_call.1} parent=39 // pred_region
        %s452 = smul.u32 16, %s21
        %p453 = scmp.lt.s32.totalorder %s20, 1
        %s454 = scalar_select %p453, %s20, 1
        %p455 = scmp.lt.s32.totalorder %s452, 15
        %s456 = scalar_select %p455, %s452, 15
        %s457 = smul.addr %s454, 16
        %s458 = sadd.s32 %s456, %s457
        %s459 = smul.addr %s458, 8
        %s460 = scalar_lea.vmem %s3, %s459
      $region44: #{tpu_custom_call.1} parent=39 // pred_fallthru
        _
    $region40: #{tpu_custom_call.1} parent=5 // pred_fallthru
      _
  $region6: #{tpu_custom_call.1} parent=0 // loop_footer
    %s13 = sadd.s32 1, %s9
  $region7: #{tpu_custom_call.1} parent=0 // loop_footer_branch
    %8 = sbr.rel target = $region3
  $region8: #{tpu_custom_call.1} parent=0 // loop_exit
    _

</llo_original>
